<compile_context>
chip_gen: v6e
topology: v6e:2x2x1
jax: 0.10.0
libtpu: 0.0.40
codegen_flags: <defaults>
</compile_context>

<pallas_src>
import functools

import jax
import jax.numpy as jnp
from jax.experimental import pallas as pl
from jax.experimental.pallas import tpu as pltpu


def _round_up(x, m):
    return ((x + m - 1) // m) * m


def _vmem_limit_bytes(default_bytes=48 * 1024 * 1024):
    """Generation-aware scoped-VMEM limit (~7/8 of physical per-core VMEM)."""
    try:
        cap = getattr(pltpu.get_tpu_info(), "vmem_capacity_bytes", None)
    except Exception:  # interpret mode / unknown chip / older API
        cap = None
    if not cap:
        return default_bytes
    # Leave headroom for compiler-internal scratch; clamp to a sane range.
    return max(default_bytes, min(int(cap) * 7 // 8, 112 * 1024 * 1024))


def _lgcn_kernel(a_hbm_ref, dinv_ref, e_ref, out_ref,
                 a_vmem_ref, prop_ref, dma_sems,
                 *, n_layers, strip_rows):
    """LightGCN propagation with the bi-normalization folded into features.

    a_hbm_ref : (Np, Np) bf16 raw 0/1 adjacency, left in HBM (streamed in)
    dinv_ref  : (Np, 1)  f32  D^{-1/2}  (zero where degree == 0 / padding)
    e_ref     : (Np, Dp) f32  layer-0 node embeddings (lane-padded)
    out_ref   : (Np, Dp) f32  mean of layer embeddings 0..n_layers
    a_vmem_ref: (Np, Np) bf16 resident VMEM copy of A (filled strip by strip)
    prop_ref  : (Np, Dp) f32  un-normalized propagation result of a layer
    dma_sems  : (2,) DMA semaphores for the streamed row strips
    """
    n_pad = a_vmem_ref.shape[0]
    d_pad = e_ref.shape[1]

    # Static row-strip schedule (last strip may be shorter; all sizes are
    # multiples of 128 because n_pad and strip_rows are).
    row_starts = tuple(range(0, n_pad, strip_rows))
    n_strips = len(row_starts)

    def _strip(idx):
        r0 = row_starts[idx]
        return r0, min(strip_rows, n_pad - r0)

    def _strip_copy(idx):
        r0, rows = _strip(idx)
        return pltpu.make_async_copy(
            a_hbm_ref.at[pl.ds(r0, rows), :],
            a_vmem_ref.at[pl.ds(r0, rows), :],
            dma_sems.at[idx % 2])

    # Kick off the first strip immediately so the HBM read of A overlaps the
    # VPU work below (broadcast / scaling / layer-0 accumulation).
    _strip_copy(0).start()

    # Hoisted lane-broadcast of D^{-1/2}; d_sq merges the post-scale of layer
    # l with the pre-scale of layer l+1.
    d_b = jnp.broadcast_to(dinv_ref[...], (n_pad, d_pad))     # (Np, Dp) f32
    d_sq = d_b * d_b

    e0 = e_ref[...]
    out_ref[...] = e0                                          # layer-0 term
    scaled = (e0 * d_b).astype(jnp.bfloat16)                   # MXU RHS, layer 1

    # ---- layer 1: fused with the streamed DMA of A, one row strip at a time.
    for s in range(n_strips):
        _strip_copy(s).wait()
        if s + 1 < n_strips:
            _strip_copy(s + 1).start()
        r0, rows = _strip(s)
        prop_ref[pl.ds(r0, rows), :] = jnp.dot(
            a_vmem_ref[pl.ds(r0, rows), :], scaled,
            preferred_element_type=jnp.float32)

    prop = prop_ref[...]
    out_ref[...] += prop * d_b

    # ---- layers 2..n_layers: A is now fully resident in VMEM.
    a = a_vmem_ref[...]
    for _ in range(n_layers - 1):
        scaled = (prop * d_sq).astype(jnp.bfloat16)
        prop = jnp.dot(a, scaled, preferred_element_type=jnp.float32)
        out_ref[...] += prop * d_b

    # Mean over layers 0..n_layers.
    out_ref[...] = out_ref[...] * (1.0 / float(n_layers + 1))


def lgcn_forward(adj_dense, embedding_weight, num_user, num_item, n_layers):
    """Equivalent of LGCN.forward(): returns (user_weight, item_weight)."""
    num_nodes, dim = embedding_weight.shape
    assert num_nodes == num_user + num_item

    emb = embedding_weight.astype(jnp.float32)
    if n_layers == 0:   # mean over the single layer-0 term
        return emb[:num_user], emb[num_user:]

    # Static bi-normalization vector (row degree on both sides, matching
    # Utils.norm(..., 'bi')).  Computed once in plain JAX; A never changes.
    deg = jnp.sum(adj_dense.astype(jnp.float32), axis=1, keepdims=True)
    d_inv_sqrt = jnp.where(deg > 0.0, jax.lax.rsqrt(deg), 0.0)

    # Pad node count and embedding dim to the 128-lane width: lane-dense
    # loads/stores, fully populated MXU, strip sizes that are (8,128)-aligned.
    n_pad = _round_up(num_nodes, 128)
    d_pad = _round_up(dim, 128)

    adj_bf16 = adj_dense.astype(jnp.bfloat16)
    if n_pad != num_nodes:
        pad_n = n_pad - num_nodes
        adj_bf16 = jnp.pad(adj_bf16, ((0, pad_n), (0, pad_n)))
        d_inv_sqrt = jnp.pad(d_inv_sqrt, ((0, pad_n), (0, 0)))
    emb = jnp.pad(emb, ((0, n_pad - num_nodes), (0, d_pad - dim)))

    strip_rows = min(512, n_pad)   # 512-row strips (multiple of 256 for v6e/v7x MXU)

    out = pl.pallas_call(
        functools.partial(_lgcn_kernel, n_layers=n_layers,
                          strip_rows=strip_rows),
        out_shape=jax.ShapeDtypeStruct((n_pad, d_pad), jnp.float32),
        grid=(1,),
        in_specs=[
            pl.BlockSpec(memory_space=pl.ANY),               # A stays in HBM
            pl.BlockSpec((n_pad, 1), lambda i: (0, 0)),      # D^{-1/2}
            pl.BlockSpec((n_pad, d_pad), lambda i: (0, 0)),  # e0
        ],
        out_specs=pl.BlockSpec((n_pad, d_pad), lambda i: (0, 0)),
        scratch_shapes=[
            pltpu.VMEM((n_pad, n_pad), jnp.bfloat16),        # resident A
            pltpu.VMEM((n_pad, d_pad), jnp.float32),         # per-layer prop
            pltpu.SemaphoreType.DMA((2,)),                   # strip DMA sems
        ],
        compiler_params=pltpu.CompilerParams(
            dimension_semantics=("arbitrary",),
            vmem_limit_bytes=_vmem_limit_bytes(),
        ),
    )(adj_bf16, d_inv_sqrt, emb)

    out = out[:num_nodes, :dim]
    # torch.split(embedding_weight, [num_user, num_item], dim=0)  -> glue
    return out[:num_user], out[num_user:]


def _reference_forward(adj_dense, emb, num_user, num_item, n_layers):
    """Plain-JAX (f32) reference mirroring the PyTorch semantics."""
    deg = jnp.sum(adj_dense, axis=1)
    d_inv_sqrt = jnp.where(deg > 0.0, 1.0 / jnp.sqrt(deg), 0.0)
    a_norm = adj_dense * d_inv_sqrt[:, None] * d_inv_sqrt[None, :]
    feats = [emb]
    x = emb
    for _ in range(n_layers):
        x = a_norm @ x
        feats.append(x)
    mean = jnp.mean(jnp.stack(feats, axis=1), axis=1)
    return mean[:num_user], mean[num_user:]


if __name__ == "__main__":
    # Small deterministic synthetic problem (LGCN.__init__ shapes).
    num_user = 32
    num_item = 32
    num_nodes = num_user + num_item
    dim = 32
    n_layers = 3

    key = jax.random.PRNGKey(0)
    k_inter, k_emb = jax.random.split(key)

    # Synthetic bipartite interaction matrix R (num_user, num_item), ~10% dense.
    r = (jax.random.uniform(k_inter, (num_user, num_item)) < 0.1).astype(jnp.float32)
    # Symmetric bipartite adjacency A = [[0, R], [R^T, 0]]  (dense stand-in for
    # the sparse_coo_tensor; normalization is folded into the kernel inputs).
    adj_dense = jnp.zeros((num_nodes, num_nodes), dtype=jnp.float32)
    adj_dense = adj_dense.at[:num_user, num_user:].set(r)
    adj_dense = adj_dense.at[num_user:, :num_user].set(r.T)

    # nn.Embedding(num_item + num_user, dim), init normal(std=0.01).
    embedding_weight = 0.01 * jax.random.normal(k_emb, (num_nodes, dim),
                                                dtype=jnp.float32)

    user_w, item_w = lgcn_forward(adj_dense, embedding_weight,
                                  num_user, num_item, n_layers)
    jax.block_until_ready((user_w, item_w))

    # Sanity check against plain-JAX f32 reference (bf16 MXU operands ->
    # loosened tolerance).
    ref_user, ref_item = _reference_forward(adj_dense, embedding_weight,
                                            num_user, num_item, n_layers)
    assert user_w.shape == (num_user, dim) and item_w.shape == (num_item, dim)
    assert jnp.allclose(user_w, ref_user, atol=1e-3, rtol=3e-2)
    assert jnp.allclose(item_w, ref_item, atol=1e-3, rtol=3e-2)

    print("KERNEL_OK")
</pallas_src>

<mosaic_0001>
module attributes {stable_mosaic.version = 11 : i64} {
  func.func @_lgcn_kernel(%arg0: i32, %arg1: memref<128x128xbf16, #tpu.memory_space<any>>, %arg2: memref<128x1xf32, #tpu.memory_space<vmem>>, %arg3: memref<128x128xf32, #tpu.memory_space<vmem>>, %arg4: memref<128x128xf32, #tpu.memory_space<vmem>>, %arg5: memref<128x128xbf16, #tpu.memory_space<vmem>>, %arg6: memref<128x128xf32, #tpu.memory_space<vmem>>, %arg7: memref<2x!tpu.dma_semaphore, #tpu.memory_space<semaphore_mem>>) attributes {dimension_semantics = [#tpu.dimension_semantics<arbitrary>], iteration_bounds = array<i64: 1>, scalar_prefetch = 0 : i64, scratch_operands = 3 : i64, tpu.core_type = #tpu.core_type<tc>, window_params = [{}, {pipeline_mode = #tpu.pipeline_mode<synchronous>, transform_indices = @transform_1, window_bounds = array<i64: 128, 1>}, {pipeline_mode = #tpu.pipeline_mode<synchronous>, transform_indices = @transform_2, window_bounds = array<i64: 128, 128>}, {pipeline_mode = #tpu.pipeline_mode<synchronous>, transform_indices = @transform_3, window_bounds = array<i64: 128, 128>}]} {
    %c0_i32 = arith.constant 0 : i32
    %c0_i32_0 = arith.constant 0 : i32
    %c0_i32_1 = arith.constant 0 : i32
    %0 = tpu.memref_slice %arg1[%c0_i32_0, %c0_i32_1] : memref<128x128xbf16, #tpu.memory_space<any>> -> memref<128x128xbf16, #tpu.memory_space<any>>
    %c0_i32_2 = arith.constant 0 : i32
    %c0_i32_3 = arith.constant 0 : i32
    %1 = tpu.memref_slice %arg5[%c0_i32_2, %c0_i32_3] : memref<128x128xbf16, #tpu.memory_space<vmem>> -> memref<128x128xbf16, #tpu.memory_space<vmem>>
    %2 = tpu.memref_slice %arg7[%c0_i32] : memref<2x!tpu.dma_semaphore, #tpu.memory_space<semaphore_mem>> -> memref<1x!tpu.dma_semaphore, #tpu.memory_space<semaphore_mem>>
    %3 = tpu.memref_squeeze %2 : memref<1x!tpu.dma_semaphore, #tpu.memory_space<semaphore_mem>> -> memref<!tpu.dma_semaphore, #tpu.memory_space<semaphore_mem>>
    tpu.enqueue_dma source(%0 : memref<128x128xbf16, #tpu.memory_space<any>>) target(%1 : memref<128x128xbf16, #tpu.memory_space<vmem>>) target_semaphore(%3 : memref<!tpu.dma_semaphore, #tpu.memory_space<semaphore_mem>>)
    %c0 = arith.constant 0 : index
    %c0_4 = arith.constant 0 : index
    %4 = vector.load %arg2[%c0, %c0_4] : memref<128x1xf32, #tpu.memory_space<vmem>>, vector<128x1xf32>
    %5 = vector.shape_cast %4 : vector<128x1xf32> to vector<128x1xf32>
    %6 = vector.broadcast %5 : vector<128x1xf32> to vector<128x128xf32>
    %7 = arith.mulf %6, %6 : vector<128x128xf32>
    %c0_5 = arith.constant 0 : index
    %c0_6 = arith.constant 0 : index
    %8 = vector.load %arg3[%c0_5, %c0_6] : memref<128x128xf32, #tpu.memory_space<vmem>>, vector<128x128xf32>
    %c0_7 = arith.constant 0 : index
    %c0_8 = arith.constant 0 : index
    %9 = vector.load %arg4[%c0_7, %c0_8] : memref<128x128xf32, #tpu.memory_space<vmem>>, vector<128x128xf32>
    tpu.vector_store %arg4[%c0_7, %c0_8], %8 {strides = array<i32>} : memref<128x128xf32, #tpu.memory_space<vmem>>, vector<128x128xf32>,
    %10 = arith.mulf %8, %6 : vector<128x128xf32>
    %11 = arith.truncf %10 : vector<128x128xf32> to vector<128x128xbf16>
    %c0_i32_9 = arith.constant 0 : i32
    %c0_i32_10 = arith.constant 0 : i32
    %c0_i32_11 = arith.constant 0 : i32
    %12 = tpu.memref_slice %arg1[%c0_i32_10, %c0_i32_11] : memref<128x128xbf16, #tpu.memory_space<any>> -> memref<128x128xbf16, #tpu.memory_space<any>>
    %c0_i32_12 = arith.constant 0 : i32
    %c0_i32_13 = arith.constant 0 : i32
    %13 = tpu.memref_slice %arg5[%c0_i32_12, %c0_i32_13] : memref<128x128xbf16, #tpu.memory_space<vmem>> -> memref<128x128xbf16, #tpu.memory_space<vmem>>
    %14 = tpu.memref_slice %arg7[%c0_i32_9] : memref<2x!tpu.dma_semaphore, #tpu.memory_space<semaphore_mem>> -> memref<1x!tpu.dma_semaphore, #tpu.memory_space<semaphore_mem>>
    %15 = tpu.memref_squeeze %14 : memref<1x!tpu.dma_semaphore, #tpu.memory_space<semaphore_mem>> -> memref<!tpu.dma_semaphore, #tpu.memory_space<semaphore_mem>>
    tpu.wait_dma2 semaphore(%15 : memref<!tpu.dma_semaphore, #tpu.memory_space<semaphore_mem>>) src(%12 : memref<128x128xbf16, #tpu.memory_space<any>>) dst(%13 : memref<128x128xbf16, #tpu.memory_space<vmem>>)
    %c0_14 = arith.constant 0 : index
    %c0_15 = arith.constant 0 : index
    %16 = vector.load %arg5[%c0_14, %c0_15] : memref<128x128xbf16, #tpu.memory_space<vmem>>, vector<128x128xbf16>
    %cst = arith.constant dense<0.000000e+00> : vector<128x128xf32>
    %17 = tpu.matmul %16, %11, %cst {dimension_numbers = #tpu.dot_dimension_numbers<[1], [0], [0], [1], [0, 0, 1, 1], [], []>} : vector<128x128xbf16>, vector<128x128xbf16>, vector<128x128xf32> -> vector<128x128xf32>
    %c0_16 = arith.constant 0 : index
    %c0_17 = arith.constant 0 : index
    %18 = vector.load %arg6[%c0_16, %c0_17] : memref<128x128xf32, #tpu.memory_space<vmem>>, vector<128x128xf32>
    tpu.vector_store %arg6[%c0_16, %c0_17], %17 {strides = array<i32>} : memref<128x128xf32, #tpu.memory_space<vmem>>, vector<128x128xf32>,
    %c0_18 = arith.constant 0 : index
    %c0_19 = arith.constant 0 : index
    %19 = vector.load %arg6[%c0_18, %c0_19] : memref<128x128xf32, #tpu.memory_space<vmem>>, vector<128x128xf32>
    %c0_20 = arith.constant 0 : index
    %c0_21 = arith.constant 0 : index
    %20 = vector.load %arg4[%c0_20, %c0_21] : memref<128x128xf32, #tpu.memory_space<vmem>>, vector<128x128xf32>
    %21 = arith.mulf %19, %6 : vector<128x128xf32>
    %22 = arith.addf %20, %21 : vector<128x128xf32>
    %c0_22 = arith.constant 0 : index
    %c0_23 = arith.constant 0 : index
    %23 = vector.load %arg4[%c0_22, %c0_23] : memref<128x128xf32, #tpu.memory_space<vmem>>, vector<128x128xf32>
    tpu.vector_store %arg4[%c0_22, %c0_23], %22 {strides = array<i32>} : memref<128x128xf32, #tpu.memory_space<vmem>>, vector<128x128xf32>,
    %c0_24 = arith.constant 0 : index
    %c0_25 = arith.constant 0 : index
    %24 = vector.load %arg5[%c0_24, %c0_25] : memref<128x128xbf16, #tpu.memory_space<vmem>>, vector<128x128xbf16>
    %25 = arith.mulf %19, %7 : vector<128x128xf32>
    %26 = arith.truncf %25 : vector<128x128xf32> to vector<128x128xbf16>
    %cst_26 = arith.constant dense<0.000000e+00> : vector<128x128xf32>
    %27 = tpu.matmul %24, %26, %cst_26 {dimension_numbers = #tpu.dot_dimension_numbers<[1], [0], [0], [1], [0, 0, 1, 1], [], []>} : vector<128x128xbf16>, vector<128x128xbf16>, vector<128x128xf32> -> vector<128x128xf32>
    %c0_27 = arith.constant 0 : index
    %c0_28 = arith.constant 0 : index
    %28 = vector.load %arg4[%c0_27, %c0_28] : memref<128x128xf32, #tpu.memory_space<vmem>>, vector<128x128xf32>
    %29 = arith.mulf %27, %6 : vector<128x128xf32>
    %30 = arith.addf %28, %29 : vector<128x128xf32>
    %c0_29 = arith.constant 0 : index
    %c0_30 = arith.constant 0 : index
    %31 = vector.load %arg4[%c0_29, %c0_30] : memref<128x128xf32, #tpu.memory_space<vmem>>, vector<128x128xf32>
    tpu.vector_store %arg4[%c0_29, %c0_30], %30 {strides = array<i32>} : memref<128x128xf32, #tpu.memory_space<vmem>>, vector<128x128xf32>,
    %32 = arith.mulf %27, %7 : vector<128x128xf32>
    %33 = arith.truncf %32 : vector<128x128xf32> to vector<128x128xbf16>
    %cst_31 = arith.constant dense<0.000000e+00> : vector<128x128xf32>
    %34 = tpu.matmul %24, %33, %cst_31 {dimension_numbers = #tpu.dot_dimension_numbers<[1], [0], [0], [1], [0, 0, 1, 1], [], []>} : vector<128x128xbf16>, vector<128x128xbf16>, vector<128x128xf32> -> vector<128x128xf32>
    %c0_32 = arith.constant 0 : index
    %c0_33 = arith.constant 0 : index
    %35 = vector.load %arg4[%c0_32, %c0_33] : memref<128x128xf32, #tpu.memory_space<vmem>>, vector<128x128xf32>
    %36 = arith.mulf %34, %6 : vector<128x128xf32>
    %37 = arith.addf %35, %36 : vector<128x128xf32>
    %c0_34 = arith.constant 0 : index
    %c0_35 = arith.constant 0 : index
    %38 = vector.load %arg4[%c0_34, %c0_35] : memref<128x128xf32, #tpu.memory_space<vmem>>, vector<128x128xf32>
    tpu.vector_store %arg4[%c0_34, %c0_35], %37 {strides = array<i32>} : memref<128x128xf32, #tpu.memory_space<vmem>>, vector<128x128xf32>,
    %c0_36 = arith.constant 0 : index
    %c0_37 = arith.constant 0 : index
    %39 = vector.load %arg4[%c0_36, %c0_37] : memref<128x128xf32, #tpu.memory_space<vmem>>, vector<128x128xf32>
    %cst_38 = arith.constant 2.500000e-01 : f32
    %40 = vector.broadcast %cst_38 : f32 to vector<128x128xf32>
    %41 = arith.mulf %39, %40 : vector<128x128xf32>
    %c0_39 = arith.constant 0 : index
    %c0_40 = arith.constant 0 : index
    %42 = vector.load %arg4[%c0_39, %c0_40] : memref<128x128xf32, #tpu.memory_space<vmem>>, vector<128x128xf32>
    tpu.vector_store %arg4[%c0_39, %c0_40], %41 {strides = array<i32>} : memref<128x128xf32, #tpu.memory_space<vmem>>, vector<128x128xf32>,
    return
  }
  func.func @transform_1(%arg0: i32) -> (i32, i32) {
    %c0_i32 = arith.constant 0 : i32
    %c0_i32_0 = arith.constant 0 : i32
    %c0_i32_1 = arith.constant 0 : i32
    return %c0_i32, %c0_i32_0 : i32, i32
  }
  func.func @transform_2(%arg0: i32) -> (i32, i32) {
    %c0_i32 = arith.constant 0 : i32
    %c0_i32_0 = arith.constant 0 : i32
    %c0_i32_1 = arith.constant 0 : i32
    return %c0_i32, %c0_i32_0 : i32, i32
  }
  func.func @transform_3(%arg0: i32) -> (i32, i32) {
    %c0_i32 = arith.constant 0 : i32
    %c0_i32_0 = arith.constant 0 : i32
    %c0_i32_1 = arith.constant 0 : i32
    return %c0_i32, %c0_i32_0 : i32, i32
  }
}

</mosaic_0001>

<llo_original>
// kernel: tpu_custom_call.1
$region0: #{tpu_custom_call.1}
  #allocation0 [shape = 'u32[]', space=smem, size = 0x4, offset = 0x4, fixed_abs, tag = 'smem constant byte address 0x4 - core index']
  #allocation1 [shape = 'u32[144,128]{1,0:T(1,128)}', space=vmem, size = 0x12000, scoped, tag = 'internal scratch']
  #allocation2 [shape = 'bf16[128,128]{1,0:T(8,128)(2,1)}', space=vmem, size = 0x8000, scoped, tag = 'scratch operand']
  #allocation3 [shape = 'f32[128,128]{1,0:T(8,128)}', space=vmem, size = 0x10000, scoped, tag = 'scratch operand']
  #allocation4 [shape = 's32[2]{0}', space=sflag, size = 0x8, scoped, tag = 'scratch operand']
  #allocation7 [shape = 's32[]', space=sflag, size = 0x4, offset = 0, fixed_abs, tag = 'sflag constant byte address 0x0 - dummy sync flag']
  #allocation8 [shape = 's32[]', space=sflag, size = 0x4, offset = 0, fixed_abs, tag = 'sflag constant byte address 0x0 - dummy sync flag']
  #allocation9 [shape = 'u32[]', space=smem, size = 0x4, offset = 0x44, fixed_abs, tag = 'smem constant byte address 0x44 - assertion arg 0']
  #allocation10 [shape = 'u32[]', space=smem, size = 0x4, offset = 0x48, fixed_abs, tag = 'smem constant byte address 0x48 - assertion arg 1']
  %s0 = inlined_call_operand.hbm [shape: bf16[128,128], index: 0, kind: input, shape index: {}]
  %s1 = inlined_call_operand.vmem [shape: f32[128,1], index: 1, kind: input, shape index: {}]
  %s2 = inlined_call_operand.vmem [shape: f32[128,128], index: 2, kind: input, shape index: {}]
  %s3 = inlined_call_operand.hbm [shape: f32[128,128], index: 3, kind: output, shape index: {}]
  %s4 = sld [smem:[#allocation0]]
  $region22: #{tpu_custom_call.1} parent=0
    _
  %s6 = ssub.s32 1, %s4
  %s7 = scalar_select 0, %s6, %s4
  $region1: #{tpu_custom_call.1} parent=0
    #allocation5 [shape = 'u8[65536]{0}', space=vmem, size = 0x10000, scoped, tag = 'output window, operand 0, single buffered']
    #allocation6 [shape = 's32[1]{0}', space=sflag, size = 0x4, scoped, tag = 'scoped memory for tpu_custom_call.1']
    %8 = vsyncpa [#allocation6], 0
    // Predicated region
    $region2: #{tpu_custom_call.1} parent=1 // pred_check
      _
    $region3: #{tpu_custom_call.1} parent=1 // pred_check_branch
      %10 = sbr.rel (0) target = $region5
    $region4: #{tpu_custom_call.1} parent=1 // pred_region
      _
    $region5: #{tpu_custom_call.1} parent=1 // pred_fallthru
      _
    // Predicated region
    $region6: #{tpu_custom_call.1} parent=1 // pred_check
      _
    $region7: #{tpu_custom_call.1} parent=1 // pred_check_branch
      %12 = sbr.rel (0) target = $region9
    $region8: #{tpu_custom_call.1} parent=1 // pred_region
      _
    $region9: #{tpu_custom_call.1} parent=1 // pred_fallthru
      _
    // Predicated region
    $region10: #{tpu_custom_call.1} parent=1 // pred_check
      _
    $region11: #{tpu_custom_call.1} parent=1 // pred_check_branch
      %15 = sbr.rel target = $region13
    $region12: #{tpu_custom_call.1} parent=1 // pred_region
      %16 = sst [smem:[#allocation9]] [#allocation8]
      %17 = sst [smem:[#allocation10]] [#allocation7]
    $region13: #{tpu_custom_call.1} parent=1 // pred_fallthru
      _
    %19 = shalt.err (0)
    %s21 = sshll.u32 [#allocation2], 4
    %s22 = int_to_ptr.vmem [resolvable:$true] %s21
    %24 = dma.hbm_to_vmem [thread:$0]  %s0, 1024, %s22, [#allocation4]
    %v25 = vld [vmem:[%s1] sm:$0xff]
    %v26 = vld [vmem:[%s1 + $0x8] sm:$0xff]
    %v27 = vld [vmem:[%s1 + $0x10] sm:$0xff]
    %v28 = vld [vmem:[%s1 + $0x18] sm:$0xff]
    %v29 = vld [vmem:[%s1 + $0x20] sm:$0xff]
    %v30 = vld [vmem:[%s1 + $0x28] sm:$0xff]
    %v31 = vld [vmem:[%s1 + $0x30] sm:$0xff]
    %v32 = vld [vmem:[%s1 + $0x38] sm:$0xff]
    %v33 = vld [vmem:[%s1 + $0x40] sm:$0xff]
    %v34 = vld [vmem:[%s1 + $0x48] sm:$0xff]
    %v35 = vld [vmem:[%s1 + $0x50] sm:$0xff]
    %v36 = vld [vmem:[%s1 + $0x58] sm:$0xff]
    %v37 = vld [vmem:[%s1 + $0x60] sm:$0xff]
    %v38 = vld [vmem:[%s1 + $0x68] sm:$0xff]
    %v39 = vld [vmem:[%s1 + $0x70] sm:$0xff]
    %v40 = vld [vmem:[%s1 + $0x78] sm:$0xff]
    %42 = vset.pattern.permute.xlu0 0
    %43 = vperm.xlu0 %42, %v25
    %v44 = vpop.permute.xlu0 %43
    %47 = vset.pattern.permute.xlu0 0
    %48 = vperm.xlu0 %47, %v26
    %v49 = vpop.permute.xlu0 %48
    %52 = vset.pattern.permute.xlu0 0
    %53 = vperm.xlu0 %52, %v27
    %v54 = vpop.permute.xlu0 %53
    %57 = vset.pattern.permute.xlu0 0
    %58 = vperm.xlu0 %57, %v28
    %v59 = vpop.permute.xlu0 %58
    %62 = vset.pattern.permute.xlu0 0
    %63 = vperm.xlu0 %62, %v29
    %v64 = vpop.permute.xlu0 %63
    %67 = vset.pattern.permute.xlu0 0
    %68 = vperm.xlu0 %67, %v30
    %v69 = vpop.permute.xlu0 %68
    %72 = vset.pattern.permute.xlu0 0
    %73 = vperm.xlu0 %72, %v31
    %v74 = vpop.permute.xlu0 %73
    %77 = vset.pattern.permute.xlu0 0
    %78 = vperm.xlu0 %77, %v32
    %v79 = vpop.permute.xlu0 %78
    %82 = vset.pattern.permute.xlu0 0
    %83 = vperm.xlu0 %82, %v33
    %v84 = vpop.permute.xlu0 %83
    %87 = vset.pattern.permute.xlu0 0
    %88 = vperm.xlu0 %87, %v34
    %v89 = vpop.permute.xlu0 %88
    %92 = vset.pattern.permute.xlu0 0
    %93 = vperm.xlu0 %92, %v35
    %v94 = vpop.permute.xlu0 %93
    %97 = vset.pattern.permute.xlu0 0
    %98 = vperm.xlu0 %97, %v36
    %v99 = vpop.permute.xlu0 %98
    %102 = vset.pattern.permute.xlu0 0
    %103 = vperm.xlu0 %102, %v37
    %v104 = vpop.permute.xlu0 %103
    %107 = vset.pattern.permute.xlu0 0
    %108 = vperm.xlu0 %107, %v38
    %v109 = vpop.permute.xlu0 %108
    %112 = vset.pattern.permute.xlu0 0
    %113 = vperm.xlu0 %112, %v39
    %v114 = vpop.permute.xlu0 %113
    %117 = vset.pattern.permute.xlu0 0
    %118 = vperm.xlu0 %117, %v40
    %v119 = vpop.permute.xlu0 %118
    %v121 = vmul.f32 %v44, %v44
    %v122 = vmul.f32 %v49, %v49
    %v123 = vmul.f32 %v54, %v54
    %v124 = vmul.f32 %v59, %v59
    %v125 = vmul.f32 %v64, %v64
    %v126 = vmul.f32 %v69, %v69
    %v127 = vmul.f32 %v74, %v74
    %v128 = vmul.f32 %v79, %v79
    %v129 = vmul.f32 %v84, %v84
    %v130 = vmul.f32 %v89, %v89
    %v131 = vmul.f32 %v94, %v94
    %v132 = vmul.f32 %v99, %v99
    %v133 = vmul.f32 %v104, %v104
    %v134 = vmul.f32 %v109, %v109
    %v135 = vmul.f32 %v114, %v114
    %v136 = vmul.f32 %v119, %v119
    %v137 = vld [vmem:[%s2] sm:$0xff]
    %v138 = vld [vmem:[%s2 + $0x8] sm:$0xff]
    %v139 = vld [vmem:[%s2 + $0x10] sm:$0xff]
    %v140 = vld [vmem:[%s2 + $0x18] sm:$0xff]
    %v141 = vld [vmem:[%s2 + $0x20] sm:$0xff]
    %v142 = vld [vmem:[%s2 + $0x28] sm:$0xff]
    %v143 = vld [vmem:[%s2 + $0x30] sm:$0xff]
    %v144 = vld [vmem:[%s2 + $0x38] sm:$0xff]
    %v145 = vld [vmem:[%s2 + $0x40] sm:$0xff]
    %v146 = vld [vmem:[%s2 + $0x48] sm:$0xff]
    %v147 = vld [vmem:[%s2 + $0x50] sm:$0xff]
    %v148 = vld [vmem:[%s2 + $0x58] sm:$0xff]
    %v149 = vld [vmem:[%s2 + $0x60] sm:$0xff]
    %v150 = vld [vmem:[%s2 + $0x68] sm:$0xff]
    %v151 = vld [vmem:[%s2 + $0x70] sm:$0xff]
    %v152 = vld [vmem:[%s2 + $0x78] sm:$0xff]
    %153 = vst [vmem:[#allocation5] sm:$0xff] %v137
    %154 = vst [vmem:[#allocation5 + $0x8] sm:$0xff] %v138
    %155 = vst [vmem:[#allocation5 + $0x10] sm:$0xff] %v139
    %156 = vst [vmem:[#allocation5 + $0x18] sm:$0xff] %v140
    %157 = vst [vmem:[#allocation5 + $0x20] sm:$0xff] %v141
    %158 = vst [vmem:[#allocation5 + $0x28] sm:$0xff] %v142
    %159 = vst [vmem:[#allocation5 + $0x30] sm:$0xff] %v143
    %160 = vst [vmem:[#allocation5 + $0x38] sm:$0xff] %v144
    %161 = vst [vmem:[#allocation5 + $0x40] sm:$0xff] %v145
    %162 = vst [vmem:[#allocation5 + $0x48] sm:$0xff] %v146
    %163 = vst [vmem:[#allocation5 + $0x50] sm:$0xff] %v147
    %164 = vst [vmem:[#allocation5 + $0x58] sm:$0xff] %v148
    %165 = vst [vmem:[#allocation5 + $0x60] sm:$0xff] %v149
    %166 = vst [vmem:[#allocation5 + $0x68] sm:$0xff] %v150
    %167 = vst [vmem:[#allocation5 + $0x70] sm:$0xff] %v151
    %168 = vst [vmem:[#allocation5 + $0x78] sm:$0xff] %v152
    %v169 = vmul.f32 %v137, %v44
    %v170 = vmul.f32 %v138, %v49
    %v171 = vmul.f32 %v139, %v54
    %v172 = vmul.f32 %v140, %v59
    %v173 = vmul.f32 %v141, %v64
    %v174 = vmul.f32 %v142, %v69
    %v175 = vmul.f32 %v143, %v74
    %v176 = vmul.f32 %v144, %v79
    %v177 = vmul.f32 %v145, %v84
    %v178 = vmul.f32 %v146, %v89
    %v179 = vmul.f32 %v147, %v94
    %v180 = vmul.f32 %v148, %v99
    %v181 = vmul.f32 %v149, %v104
    %v182 = vmul.f32 %v150, %v109
    %v183 = vmul.f32 %v151, %v114
    %v184 = vmul.f32 %v152, %v119
    %v185 = vpack.c.bf16 %v170, %v169
    %v186 = vpack.c.bf16 %v172, %v171
    %v187 = vpack.c.bf16 %v174, %v173
    %v188 = vpack.c.bf16 %v176, %v175
    %v189 = vpack.c.bf16 %v178, %v177
    %v190 = vpack.c.bf16 %v180, %v179
    %v191 = vpack.c.bf16 %v182, %v181
    %v192 = vpack.c.bf16 %v184, %v183
    %s193 = smul.u32 4, 16
    %s194 = smul.u32 %s193, 1
    %s195 = sshll.u32 %s194, 4
    %196 = dma.done [#allocation4], %s195
    %v197 = vld [vmem:[#allocation2] sm:$0xf]
    %v198 = vld [vmem:[#allocation2 + $0x4] sm:$0xf]
    %v199 = vld [vmem:[#allocation2 + $0x8] sm:$0xf]
    %v200 = vld [vmem:[#allocation2 + $0xc] sm:$0xf]
    %v201 = vld [vmem:[#allocation2 + $0x10] sm:$0xf]
    %v202 = vld [vmem:[#allocation2 + $0x14] sm:$0xf]
    %v203 = vld [vmem:[#allocation2 + $0x18] sm:$0xf]
    %v204 = vld [vmem:[#allocation2 + $0x1c] sm:$0xf]
    %v205 = vld [vmem:[#allocation2 + $0x20] sm:$0xf]
    %v206 = vld [vmem:[#allocation2 + $0x24] sm:$0xf]
    %v207 = vld [vmem:[#allocation2 + $0x28] sm:$0xf]
    %v208 = vld [vmem:[#allocation2 + $0x2c] sm:$0xf]
    %v209 = vld [vmem:[#allocation2 + $0x30] sm:$0xf]
    %v210 = vld [vmem:[#allocation2 + $0x34] sm:$0xf]
    %v211 = vld [vmem:[#allocation2 + $0x38] sm:$0xf]
    %v212 = vld [vmem:[#allocation2 + $0x3c] sm:$0xf]
    %v229 = vunpack.c.l.b16 %v197
    %v230 = vunpack.c.l.b16 %v198
    %v231 = vunpack.c.l.b16 %v199
    %v232 = vunpack.c.l.b16 %v200
    %v233 = vunpack.c.l.b16 %v201
    %v234 = vunpack.c.l.b16 %v202
    %v235 = vunpack.c.l.b16 %v203
    %v236 = vunpack.c.l.b16 %v204
    %v237 = vunpack.c.l.b16 %v205
    %v238 = vunpack.c.l.b16 %v206
    %v239 = vunpack.c.l.b16 %v207
    %v240 = vunpack.c.l.b16 %v208
    %v241 = vunpack.c.l.b16 %v209
    %v242 = vunpack.c.l.b16 %v210
    %v243 = vunpack.c.l.b16 %v211
    %v244 = vunpack.c.l.b16 %v212
    %v245 = vpack.c.b16 %v230, %v229
    %v246 = vpack.c.b16 %v232, %v231
    %v247 = vpack.c.b16 %v234, %v233
    %v248 = vpack.c.b16 %v236, %v235
    %v249 = vpack.c.b16 %v238, %v237
    %v250 = vpack.c.b16 %v240, %v239
    %v251 = vpack.c.b16 %v242, %v241
    %v252 = vpack.c.b16 %v244, %v243
    %261 = vmatprep.subr.bf16.mxu0 0
    %262 = vmatpush1.bf16.msra.mxu0 %v192
    %263 = vmatprep.subr.bf16.mxu0 0
    %264 = vmatpush1.bf16.msra.mxu0 %v191
    %265 = vmatprep.subr.bf16.mxu0 0
    %266 = vmatpush1.bf16.msra.mxu0 %v190
    %267 = vmatprep.subr.bf16.mxu0 0
    %268 = vmatpush1.bf16.msra.mxu0 %v189
    %269 = vmatprep.subr.bf16.mxu0 0
    %270 = vmatpush1.bf16.msra.mxu0 %v188
    %271 = vmatprep.subr.bf16.mxu0 0
    %272 = vmatpush1.bf16.msra.mxu0 %v187
    %273 = vmatprep.subr.bf16.mxu0 0
    %274 = vmatpush1.bf16.msra.mxu0 %v186
    %275 = vmatprep.subr.bf16.mxu0 0
    %276 = vmatpush1.bf16.msra.mxu0 %v185
    %277 = vmatprep.subr.bf16.mxu0 0
    %278 = vmatpush2.bf16.msra.mxu0 0
    %279 = vmatprep.subr.bf16.mxu0 0
    %280 = vmatpush2.bf16.msra.mxu0 0
    %281 = vmatprep.subr.bf16.mxu0 0
    %282 = vmatpush2.bf16.msra.mxu0 0
    %283 = vmatprep.subr.bf16.mxu0 0
    %284 = vmatpush2.bf16.msra.mxu0 0
    %285 = vmatprep.subr.bf16.mxu0 0
    %286 = vmatpush2.bf16.msra.mxu0 0
    %287 = vmatprep.subr.bf16.mxu0 0
    %288 = vmatpush2.bf16.msra.mxu0 0
    %289 = vmatprep.subr.bf16.mxu0 0
    %290 = vmatpush2.bf16.msra.mxu0 0
    %291 = vmatprep.subr.bf16.mxu0 0
    %292 = vmatpush2.bf16.msra.mxu0 0
    %293 = vmatprep.mubr.bf16.mxu0 0
    %294 = vmatmul.mubr.bf16.gmra.mxu0 %v245
    %v295 = vpop.f32.mrf.mxu0
    %v296 = vadd.f32 0.0, %v295
    %v297 = vpop.f32.mrf.mxu0
    %v298 = vpop.f32.mrf.mxu0
    %v299 = vadd.f32 0.0, %v298
    %v300 = vpop.f32.mrf.mxu0
    %301 = vmatprep.mubr.bf16.mxu0 0
    %302 = vmatmul.mubr.bf16.gmra.mxu0 %v246
    %v303 = vpop.f32.mrf.mxu0
    %v304 = vadd.f32 0.0, %v303
    %v305 = vpop.f32.mrf.mxu0
    %v306 = vpop.f32.mrf.mxu0
    %v307 = vadd.f32 0.0, %v306
    %v308 = vpop.f32.mrf.mxu0
    %309 = vmatprep.mubr.bf16.mxu0 0
    %310 = vmatmul.mubr.bf16.gmra.mxu0 %v247
    %v311 = vpop.f32.mrf.mxu0
    %v312 = vadd.f32 0.0, %v311
    %v313 = vpop.f32.mrf.mxu0
    %v314 = vpop.f32.mrf.mxu0
    %v315 = vadd.f32 0.0, %v314
    %v316 = vpop.f32.mrf.mxu0
    %317 = vmatprep.mubr.bf16.mxu0 0
    %318 = vmatmul.mubr.bf16.gmra.mxu0 %v248
    %v319 = vpop.f32.mrf.mxu0
    %v320 = vadd.f32 0.0, %v319
    %v321 = vpop.f32.mrf.mxu0
    %v322 = vpop.f32.mrf.mxu0
    %v323 = vadd.f32 0.0, %v322
    %v324 = vpop.f32.mrf.mxu0
    %325 = vmatprep.mubr.bf16.mxu0 0
    %326 = vmatmul.mubr.bf16.gmra.mxu0 %v249
    %v327 = vpop.f32.mrf.mxu0
    %v328 = vadd.f32 0.0, %v327
    %v329 = vpop.f32.mrf.mxu0
    %v330 = vpop.f32.mrf.mxu0
    %v331 = vadd.f32 0.0, %v330
    %v332 = vpop.f32.mrf.mxu0
    %333 = vmatprep.mubr.bf16.mxu0 0
    %334 = vmatmul.mubr.bf16.gmra.mxu0 %v250
    %v335 = vpop.f32.mrf.mxu0
    %v336 = vadd.f32 0.0, %v335
    %v337 = vpop.f32.mrf.mxu0
    %v338 = vpop.f32.mrf.mxu0
    %v339 = vadd.f32 0.0, %v338
    %v340 = vpop.f32.mrf.mxu0
    %341 = vmatprep.mubr.bf16.mxu0 0
    %342 = vmatmul.mubr.bf16.gmra.mxu0 %v251
    %v343 = vpop.f32.mrf.mxu0
    %v344 = vadd.f32 0.0, %v343
    %v345 = vpop.f32.mrf.mxu0
    %v346 = vpop.f32.mrf.mxu0
    %v347 = vadd.f32 0.0, %v346
    %v348 = vpop.f32.mrf.mxu0
    %349 = vmatprep.mubr.bf16.mxu0 0
    %350 = vmatmul.mubr.bf16.gmra.mxu0 %v252
    %v351 = vpop.f32.mrf.mxu0
    %v352 = vadd.f32 0.0, %v351
    %v353 = vpop.f32.mrf.mxu0
    %v354 = vpop.f32.mrf.mxu0
    %v355 = vadd.f32 0.0, %v354
    %v356 = vpop.f32.mrf.mxu0
    %357 = vdwg.mxu0
    %358 = vst [vmem:[#allocation3] sm:$0xff] %v296
    %359 = vst [vmem:[#allocation3 + $0x8] sm:$0xff] %v299
    %360 = vst [vmem:[#allocation3 + $0x10] sm:$0xff] %v304
    %361 = vst [vmem:[#allocation3 + $0x18] sm:$0xff] %v307
    %362 = vst [vmem:[#allocation3 + $0x20] sm:$0xff] %v312
    %363 = vst [vmem:[#allocation3 + $0x28] sm:$0xff] %v315
    %364 = vst [vmem:[#allocation3 + $0x30] sm:$0xff] %v320
    %365 = vst [vmem:[#allocation3 + $0x38] sm:$0xff] %v323
    %366 = vst [vmem:[#allocation3 + $0x40] sm:$0xff] %v328
    %367 = vst [vmem:[#allocation3 + $0x48] sm:$0xff] %v331
    %368 = vst [vmem:[#allocation3 + $0x50] sm:$0xff] %v336
    %369 = vst [vmem:[#allocation3 + $0x58] sm:$0xff] %v339
    %370 = vst [vmem:[#allocation3 + $0x60] sm:$0xff] %v344
    %371 = vst [vmem:[#allocation3 + $0x68] sm:$0xff] %v347
    %372 = vst [vmem:[#allocation3 + $0x70] sm:$0xff] %v352
    %373 = vst [vmem:[#allocation3 + $0x78] sm:$0xff] %v355
    %v374 = vld [vmem:[#allocation3] sm:$0xff]
    %v375 = vld [vmem:[#allocation3 + $0x8] sm:$0xff]
    %v376 = vld [vmem:[#allocation3 + $0x10] sm:$0xff]
    %v377 = vld [vmem:[#allocation3 + $0x18] sm:$0xff]
    %v378 = vld [vmem:[#allocation3 + $0x20] sm:$0xff]
    %v379 = vld [vmem:[#allocation3 + $0x28] sm:$0xff]
    %v380 = vld [vmem:[#allocation3 + $0x30] sm:$0xff]
    %v381 = vld [vmem:[#allocation3 + $0x38] sm:$0xff]
    %v382 = vld [vmem:[#allocation3 + $0x40] sm:$0xff]
    %v383 = vld [vmem:[#allocation3 + $0x48] sm:$0xff]
    %v384 = vld [vmem:[#allocation3 + $0x50] sm:$0xff]
    %v385 = vld [vmem:[#allocation3 + $0x58] sm:$0xff]
    %v386 = vld [vmem:[#allocation3 + $0x60] sm:$0xff]
    %v387 = vld [vmem:[#allocation3 + $0x68] sm:$0xff]
    %v388 = vld [vmem:[#allocation3 + $0x70] sm:$0xff]
    %v389 = vld [vmem:[#allocation3 + $0x78] sm:$0xff]
    %v390 = vld [vmem:[#allocation5] sm:$0xff]
    %v391 = vld [vmem:[#allocation5 + $0x8] sm:$0xff]
    %v392 = vld [vmem:[#allocation5 + $0x10] sm:$0xff]
    %v393 = vld [vmem:[#allocation5 + $0x18] sm:$0xff]
    %v394 = vld [vmem:[#allocation5 + $0x20] sm:$0xff]
    %v395 = vld [vmem:[#allocation5 + $0x28] sm:$0xff]
    %v396 = vld [vmem:[#allocation5 + $0x30] sm:$0xff]
    %v397 = vld [vmem:[#allocation5 + $0x38] sm:$0xff]
    %v398 = vld [vmem:[#allocation5 + $0x40] sm:$0xff]
    %v399 = vld [vmem:[#allocation5 + $0x48] sm:$0xff]
    %v400 = vld [vmem:[#allocation5 + $0x50] sm:$0xff]
    %v401 = vld [vmem:[#allocation5 + $0x58] sm:$0xff]
    %v402 = vld [vmem:[#allocation5 + $0x60] sm:$0xff]
    %v403 = vld [vmem:[#allocation5 + $0x68] sm:$0xff]
    %v404 = vld [vmem:[#allocation5 + $0x70] sm:$0xff]
    %v405 = vld [vmem:[#allocation5 + $0x78] sm:$0xff]
    %v406 = vmul.f32 %v374, %v44
    %v407 = vmul.f32 %v375, %v49
    %v408 = vmul.f32 %v376, %v54
    %v409 = vmul.f32 %v377, %v59
    %v410 = vmul.f32 %v378, %v64
    %v411 = vmul.f32 %v379, %v69
    %v412 = vmul.f32 %v380, %v74
    %v413 = vmul.f32 %v381, %v79
    %v414 = vmul.f32 %v382, %v84
    %v415 = vmul.f32 %v383, %v89
    %v416 = vmul.f32 %v384, %v94
    %v417 = vmul.f32 %v385, %v99
    %v418 = vmul.f32 %v386, %v104
    %v419 = vmul.f32 %v387, %v109
    %v420 = vmul.f32 %v388, %v114
    %v421 = vmul.f32 %v389, %v119
    %v422 = vadd.f32 %v390, %v406
    %v423 = vadd.f32 %v391, %v407
    %v424 = vadd.f32 %v392, %v408
    %v425 = vadd.f32 %v393, %v409
    %v426 = vadd.f32 %v394, %v410
    %v427 = vadd.f32 %v395, %v411
    %v428 = vadd.f32 %v396, %v412
    %v429 = vadd.f32 %v397, %v413
    %v430 = vadd.f32 %v398, %v414
    %v431 = vadd.f32 %v399, %v415
    %v432 = vadd.f32 %v400, %v416
    %v433 = vadd.f32 %v401, %v417
    %v434 = vadd.f32 %v402, %v418
    %v435 = vadd.f32 %v403, %v419
    %v436 = vadd.f32 %v404, %v420
    %v437 = vadd.f32 %v405, %v421
    %438 = vst [vmem:[#allocation5] sm:$0xff] %v422
    %439 = vst [vmem:[#allocation5 + $0x8] sm:$0xff] %v423
    %440 = vst [vmem:[#allocation5 + $0x10] sm:$0xff] %v424
    %441 = vst [vmem:[#allocation5 + $0x18] sm:$0xff] %v425
    %442 = vst [vmem:[#allocation5 + $0x20] sm:$0xff] %v426
    %443 = vst [vmem:[#allocation5 + $0x28] sm:$0xff] %v427
    %444 = vst [vmem:[#allocation5 + $0x30] sm:$0xff] %v428
    %445 = vst [vmem:[#allocation5 + $0x38] sm:$0xff] %v429
    %446 = vst [vmem:[#allocation5 + $0x40] sm:$0xff] %v430
    %447 = vst [vmem:[#allocation5 + $0x48] sm:$0xff] %v431
    %448 = vst [vmem:[#allocation5 + $0x50] sm:$0xff] %v432
    %449 = vst [vmem:[#allocation5 + $0x58] sm:$0xff] %v433
    %450 = vst [vmem:[#allocation5 + $0x60] sm:$0xff] %v434
    %451 = vst [vmem:[#allocation5 + $0x68] sm:$0xff] %v435
    %452 = vst [vmem:[#allocation5 + $0x70] sm:$0xff] %v436
    %453 = vst [vmem:[#allocation5 + $0x78] sm:$0xff] %v437
    %v454 = vld [vmem:[#allocation2] sm:$0xf]
    %v455 = vld [vmem:[#allocation2 + $0x4] sm:$0xf]
    %v456 = vld [vmem:[#allocation2 + $0x8] sm:$0xf]
    %v457 = vld [vmem:[#allocation2 + $0xc] sm:$0xf]
    %v458 = vld [vmem:[#allocation2 + $0x10] sm:$0xf]
    %v459 = vld [vmem:[#allocation2 + $0x14] sm:$0xf]
    %v460 = vld [vmem:[#allocation2 + $0x18] sm:$0xf]
    %v461 = vld [vmem:[#allocation2 + $0x1c] sm:$0xf]
    %v462 = vld [vmem:[#allocation2 + $0x20] sm:$0xf]
    %v463 = vld [vmem:[#allocation2 + $0x24] sm:$0xf]
    %v464 = vld [vmem:[#allocation2 + $0x28] sm:$0xf]
    %v465 = vld [vmem:[#allocation2 + $0x2c] sm:$0xf]
    %v466 = vld [vmem:[#allocation2 + $0x30] sm:$0xf]
    %v467 = vld [vmem:[#allocation2 + $0x34] sm:$0xf]
    %v468 = vld [vmem:[#allocation2 + $0x38] sm:$0xf]
    %v469 = vld [vmem:[#allocation2 + $0x3c] sm:$0xf]
    %v470 = vmul.f32 %v374, %v121
    %v471 = vmul.f32 %v375, %v122
    %v472 = vmul.f32 %v376, %v123
    %v473 = vmul.f32 %v377, %v124
    %v474 = vmul.f32 %v378, %v125
    %v475 = vmul.f32 %v379, %v126
    %v476 = vmul.f32 %v380, %v127
    %v477 = vmul.f32 %v381, %v128
    %v478 = vmul.f32 %v382, %v129
    %v479 = vmul.f32 %v383, %v130
    %v480 = vmul.f32 %v384, %v131
    %v481 = vmul.f32 %v385, %v132
    %v482 = vmul.f32 %v386, %v133
    %v483 = vmul.f32 %v387, %v134
    %v484 = vmul.f32 %v388, %v135
    %v485 = vmul.f32 %v389, %v136
    %v486 = vpack.c.bf16 %v471, %v470
    %v487 = vpack.c.bf16 %v473, %v472
    %v488 = vpack.c.bf16 %v475, %v474
    %v489 = vpack.c.bf16 %v477, %v476
    %v490 = vpack.c.bf16 %v479, %v478
    %v491 = vpack.c.bf16 %v481, %v480
    %v492 = vpack.c.bf16 %v483, %v482
    %v493 = vpack.c.bf16 %v485, %v484
    %v510 = vunpack.c.l.b16 %v454
    %v511 = vunpack.c.l.b16 %v455
    %v512 = vunpack.c.l.b16 %v456
    %v513 = vunpack.c.l.b16 %v457
    %v514 = vunpack.c.l.b16 %v458
    %v515 = vunpack.c.l.b16 %v459
    %v516 = vunpack.c.l.b16 %v460
    %v517 = vunpack.c.l.b16 %v461
    %v518 = vunpack.c.l.b16 %v462
    %v519 = vunpack.c.l.b16 %v463
    %v520 = vunpack.c.l.b16 %v464
    %v521 = vunpack.c.l.b16 %v465
    %v522 = vunpack.c.l.b16 %v466
    %v523 = vunpack.c.l.b16 %v467
    %v524 = vunpack.c.l.b16 %v468
    %v525 = vunpack.c.l.b16 %v469
    %v526 = vpack.c.b16 %v511, %v510
    %v527 = vpack.c.b16 %v513, %v512
    %v528 = vpack.c.b16 %v515, %v514
    %v529 = vpack.c.b16 %v517, %v516
    %v530 = vpack.c.b16 %v519, %v518
    %v531 = vpack.c.b16 %v521, %v520
    %v532 = vpack.c.b16 %v523, %v522
    %v533 = vpack.c.b16 %v525, %v524
    %542 = vmatprep.subr.bf16.mxu0 0
    %543 = vmatpush1.bf16.msra.mxu0 %v493
    %544 = vmatprep.subr.bf16.mxu0 0
    %545 = vmatpush1.bf16.msra.mxu0 %v492
    %546 = vmatprep.subr.bf16.mxu0 0
    %547 = vmatpush1.bf16.msra.mxu0 %v491
    %548 = vmatprep.subr.bf16.mxu0 0
    %549 = vmatpush1.bf16.msra.mxu0 %v490
    %550 = vmatprep.subr.bf16.mxu0 0
    %551 = vmatpush1.bf16.msra.mxu0 %v489
    %552 = vmatprep.subr.bf16.mxu0 0
    %553 = vmatpush1.bf16.msra.mxu0 %v488
    %554 = vmatprep.subr.bf16.mxu0 0
    %555 = vmatpush1.bf16.msra.mxu0 %v487
    %556 = vmatprep.subr.bf16.mxu0 0
    %557 = vmatpush1.bf16.msra.mxu0 %v486
    %558 = vmatprep.subr.bf16.mxu0 0
    %559 = vmatpush2.bf16.msra.mxu0 0
    %560 = vmatprep.subr.bf16.mxu0 0
    %561 = vmatpush2.bf16.msra.mxu0 0
    %562 = vmatprep.subr.bf16.mxu0 0
    %563 = vmatpush2.bf16.msra.mxu0 0
    %564 = vmatprep.subr.bf16.mxu0 0
    %565 = vmatpush2.bf16.msra.mxu0 0
    %566 = vmatprep.subr.bf16.mxu0 0
    %567 = vmatpush2.bf16.msra.mxu0 0
    %568 = vmatprep.subr.bf16.mxu0 0
    %569 = vmatpush2.bf16.msra.mxu0 0
    %570 = vmatprep.subr.bf16.mxu0 0
    %571 = vmatpush2.bf16.msra.mxu0 0
    %572 = vmatprep.subr.bf16.mxu0 0
    %573 = vmatpush2.bf16.msra.mxu0 0
    %574 = vmatprep.mubr.bf16.mxu0 0
    %575 = vmatmul.mubr.bf16.gmra.mxu0 %v526
    %v576 = vpop.f32.mrf.mxu0
    %v577 = vadd.f32 0.0, %v576
    %v578 = vpop.f32.mrf.mxu0
    %v579 = vpop.f32.mrf.mxu0
    %v580 = vadd.f32 0.0, %v579
    %v581 = vpop.f32.mrf.mxu0
    %582 = vmatprep.mubr.bf16.mxu0 0
    %583 = vmatmul.mubr.bf16.gmra.mxu0 %v527
    %v584 = vpop.f32.mrf.mxu0
    %v585 = vadd.f32 0.0, %v584
    %v586 = vpop.f32.mrf.mxu0
    %v587 = vpop.f32.mrf.mxu0
    %v588 = vadd.f32 0.0, %v587
    %v589 = vpop.f32.mrf.mxu0
    %590 = vmatprep.mubr.bf16.mxu0 0
    %591 = vmatmul.mubr.bf16.gmra.mxu0 %v528
    %v592 = vpop.f32.mrf.mxu0
    %v593 = vadd.f32 0.0, %v592
    %v594 = vpop.f32.mrf.mxu0
    %v595 = vpop.f32.mrf.mxu0
    %v596 = vadd.f32 0.0, %v595
    %v597 = vpop.f32.mrf.mxu0
    %598 = vmatprep.mubr.bf16.mxu0 0
    %599 = vmatmul.mubr.bf16.gmra.mxu0 %v529
    %v600 = vpop.f32.mrf.mxu0
    %v601 = vadd.f32 0.0, %v600
    %v602 = vpop.f32.mrf.mxu0
    %v603 = vpop.f32.mrf.mxu0
    %v604 = vadd.f32 0.0, %v603
    %v605 = vpop.f32.mrf.mxu0
    %606 = vmatprep.mubr.bf16.mxu0 0
    %607 = vmatmul.mubr.bf16.gmra.mxu0 %v530
    %v608 = vpop.f32.mrf.mxu0
    %v609 = vadd.f32 0.0, %v608
    %v610 = vpop.f32.mrf.mxu0
    %v611 = vpop.f32.mrf.mxu0
    %v612 = vadd.f32 0.0, %v611
    %v613 = vpop.f32.mrf.mxu0
    %614 = vmatprep.mubr.bf16.mxu0 0
    %615 = vmatmul.mubr.bf16.gmra.mxu0 %v531
    %v616 = vpop.f32.mrf.mxu0
    %v617 = vadd.f32 0.0, %v616
    %v618 = vpop.f32.mrf.mxu0
    %v619 = vpop.f32.mrf.mxu0
    %v620 = vadd.f32 0.0, %v619
    %v621 = vpop.f32.mrf.mxu0
    %622 = vmatprep.mubr.bf16.mxu0 0
    %623 = vmatmul.mubr.bf16.gmra.mxu0 %v532
    %v624 = vpop.f32.mrf.mxu0
    %v625 = vadd.f32 0.0, %v624
    %v626 = vpop.f32.mrf.mxu0
    %v627 = vpop.f32.mrf.mxu0
    %v628 = vadd.f32 0.0, %v627
    %v629 = vpop.f32.mrf.mxu0
    %630 = vmatprep.mubr.bf16.mxu0 0
    %631 = vmatmul.mubr.bf16.gmra.mxu0 %v533
    %v632 = vpop.f32.mrf.mxu0
    %v633 = vadd.f32 0.0, %v632
    %v634 = vpop.f32.mrf.mxu0
    %v635 = vpop.f32.mrf.mxu0
    %v636 = vadd.f32 0.0, %v635
    %v637 = vpop.f32.mrf.mxu0
    %638 = vdwg.mxu0
    %v639 = vld [vmem:[#allocation5] sm:$0xff]
    %v640 = vld [vmem:[#allocation5 + $0x8] sm:$0xff]
    %v641 = vld [vmem:[#allocation5 + $0x10] sm:$0xff]
    %v642 = vld [vmem:[#allocation5 + $0x18] sm:$0xff]
    %v643 = vld [vmem:[#allocation5 + $0x20] sm:$0xff]
    %v644 = vld [vmem:[#allocation5 + $0x28] sm:$0xff]
    %v645 = vld [vmem:[#allocation5 + $0x30] sm:$0xff]
    %v646 = vld [vmem:[#allocation5 + $0x38] sm:$0xff]
    %v647 = vld [vmem:[#allocation5 + $0x40] sm:$0xff]
    %v648 = vld [vmem:[#allocation5 + $0x48] sm:$0xff]
    %v649 = vld [vmem:[#allocation5 + $0x50] sm:$0xff]
    %v650 = vld [vmem:[#allocation5 + $0x58] sm:$0xff]
    %v651 = vld [vmem:[#allocation5 + $0x60] sm:$0xff]
    %v652 = vld [vmem:[#allocation5 + $0x68] sm:$0xff]
    %v653 = vld [vmem:[#allocation5 + $0x70] sm:$0xff]
    %v654 = vld [vmem:[#allocation5 + $0x78] sm:$0xff]
    %v655 = vmul.f32 %v577, %v44
    %v656 = vmul.f32 %v580, %v49
    %v657 = vmul.f32 %v585, %v54
    %v658 = vmul.f32 %v588, %v59
    %v659 = vmul.f32 %v593, %v64
    %v660 = vmul.f32 %v596, %v69
    %v661 = vmul.f32 %v601, %v74
    %v662 = vmul.f32 %v604, %v79
    %v663 = vmul.f32 %v609, %v84
    %v664 = vmul.f32 %v612, %v89
    %v665 = vmul.f32 %v617, %v94
    %v666 = vmul.f32 %v620, %v99
    %v667 = vmul.f32 %v625, %v104
    %v668 = vmul.f32 %v628, %v109
    %v669 = vmul.f32 %v633, %v114
    %v670 = vmul.f32 %v636, %v119
    %v671 = vadd.f32 %v639, %v655
    %v672 = vadd.f32 %v640, %v656
    %v673 = vadd.f32 %v641, %v657
    %v674 = vadd.f32 %v642, %v658
    %v675 = vadd.f32 %v643, %v659
    %v676 = vadd.f32 %v644, %v660
    %v677 = vadd.f32 %v645, %v661
    %v678 = vadd.f32 %v646, %v662
    %v679 = vadd.f32 %v647, %v663
    %v680 = vadd.f32 %v648, %v664
    %v681 = vadd.f32 %v649, %v665
    %v682 = vadd.f32 %v650, %v666
    %v683 = vadd.f32 %v651, %v667
    %v684 = vadd.f32 %v652, %v668
    %v685 = vadd.f32 %v653, %v669
    %v686 = vadd.f32 %v654, %v670
    %687 = vst [vmem:[#allocation5] sm:$0xff] %v671
    %688 = vst [vmem:[#allocation5 + $0x8] sm:$0xff] %v672
    %689 = vst [vmem:[#allocation5 + $0x10] sm:$0xff] %v673
    %690 = vst [vmem:[#allocation5 + $0x18] sm:$0xff] %v674
    %691 = vst [vmem:[#allocation5 + $0x20] sm:$0xff] %v675
    %692 = vst [vmem:[#allocation5 + $0x28] sm:$0xff] %v676
    %693 = vst [vmem:[#allocation5 + $0x30] sm:$0xff] %v677
    %694 = vst [vmem:[#allocation5 + $0x38] sm:$0xff] %v678
    %695 = vst [vmem:[#allocation5 + $0x40] sm:$0xff] %v679
    %696 = vst [vmem:[#allocation5 + $0x48] sm:$0xff] %v680
    %697 = vst [vmem:[#allocation5 + $0x50] sm:$0xff] %v681
    %698 = vst [vmem:[#allocation5 + $0x58] sm:$0xff] %v682
    %699 = vst [vmem:[#allocation5 + $0x60] sm:$0xff] %v683
    %700 = vst [vmem:[#allocation5 + $0x68] sm:$0xff] %v684
    %701 = vst [vmem:[#allocation5 + $0x70] sm:$0xff] %v685
    %702 = vst [vmem:[#allocation5 + $0x78] sm:$0xff] %v686
    %v703 = vmul.f32 %v577, %v121
    %v704 = vmul.f32 %v580, %v122
    %v705 = vmul.f32 %v585, %v123
    %v706 = vmul.f32 %v588, %v124
    %v707 = vmul.f32 %v593, %v125
    %v708 = vmul.f32 %v596, %v126
    %v709 = vmul.f32 %v601, %v127
    %v710 = vmul.f32 %v604, %v128
    %v711 = vmul.f32 %v609, %v129
    %v712 = vmul.f32 %v612, %v130
    %v713 = vmul.f32 %v617, %v131
    %v714 = vmul.f32 %v620, %v132
    %v715 = vmul.f32 %v625, %v133
    %v716 = vmul.f32 %v628, %v134
    %v717 = vmul.f32 %v633, %v135
    %v718 = vmul.f32 %v636, %v136
    %v719 = vpack.c.bf16 %v704, %v703
    %v720 = vpack.c.bf16 %v706, %v705
    %v721 = vpack.c.bf16 %v708, %v707
    %v722 = vpack.c.bf16 %v710, %v709
    %v723 = vpack.c.bf16 %v712, %v711
    %v724 = vpack.c.bf16 %v714, %v713
    %v725 = vpack.c.bf16 %v716, %v715
    %v726 = vpack.c.bf16 %v718, %v717
    %727 = vmatprep.subr.bf16.mxu0 0
    %728 = vmatpush1.bf16.msra.mxu0 %v726
    %729 = vmatprep.subr.bf16.mxu0 0
    %730 = vmatpush1.bf16.msra.mxu0 %v725
    %731 = vmatprep.subr.bf16.mxu0 0
    %732 = vmatpush1.bf16.msra.mxu0 %v724
    %733 = vmatprep.subr.bf16.mxu0 0
    %734 = vmatpush1.bf16.msra.mxu0 %v723
    %735 = vmatprep.subr.bf16.mxu0 0
    %736 = vmatpush1.bf16.msra.mxu0 %v722
    %737 = vmatprep.subr.bf16.mxu0 0
    %738 = vmatpush1.bf16.msra.mxu0 %v721
    %739 = vmatprep.subr.bf16.mxu0 0
    %740 = vmatpush1.bf16.msra.mxu0 %v720
    %741 = vmatprep.subr.bf16.mxu0 0
    %742 = vmatpush1.bf16.msra.mxu0 %v719
    %743 = vmatprep.subr.bf16.mxu0 0
    %744 = vmatpush2.bf16.msra.mxu0 0
    %745 = vmatprep.subr.bf16.mxu0 0
    %746 = vmatpush2.bf16.msra.mxu0 0
    %747 = vmatprep.subr.bf16.mxu0 0
    %748 = vmatpush2.bf16.msra.mxu0 0
    %749 = vmatprep.subr.bf16.mxu0 0
    %750 = vmatpush2.bf16.msra.mxu0 0
    %751 = vmatprep.subr.bf16.mxu0 0
    %752 = vmatpush2.bf16.msra.mxu0 0
    %753 = vmatprep.subr.bf16.mxu0 0
    %754 = vmatpush2.bf16.msra.mxu0 0
    %755 = vmatprep.subr.bf16.mxu0 0
    %756 = vmatpush2.bf16.msra.mxu0 0
    %757 = vmatprep.subr.bf16.mxu0 0
    %758 = vmatpush2.bf16.msra.mxu0 0
    %759 = vmatprep.mubr.bf16.mxu0 0
    %760 = vmatmul.mubr.bf16.gmra.mxu0 %v526
    %v761 = vpop.f32.mrf.mxu0
    %v762 = vadd.f32 0.0, %v761
    %v763 = vpop.f32.mrf.mxu0
    %v764 = vpop.f32.mrf.mxu0
    %v765 = vadd.f32 0.0, %v764
    %v766 = vpop.f32.mrf.mxu0
    %767 = vmatprep.mubr.bf16.mxu0 0
    %768 = vmatmul.mubr.bf16.gmra.mxu0 %v527
    %v769 = vpop.f32.mrf.mxu0
    %v770 = vadd.f32 0.0, %v769
    %v771 = vpop.f32.mrf.mxu0
    %v772 = vpop.f32.mrf.mxu0
    %v773 = vadd.f32 0.0, %v772
    %v774 = vpop.f32.mrf.mxu0
    %775 = vmatprep.mubr.bf16.mxu0 0
    %776 = vmatmul.mubr.bf16.gmra.mxu0 %v528
    %v777 = vpop.f32.mrf.mxu0
    %v778 = vadd.f32 0.0, %v777
    %v779 = vpop.f32.mrf.mxu0
    %v780 = vpop.f32.mrf.mxu0
    %v781 = vadd.f32 0.0, %v780
    %v782 = vpop.f32.mrf.mxu0
    %783 = vmatprep.mubr.bf16.mxu0 0
    %784 = vmatmul.mubr.bf16.gmra.mxu0 %v529
    %v785 = vpop.f32.mrf.mxu0
    %v786 = vadd.f32 0.0, %v785
    %v787 = vpop.f32.mrf.mxu0
    %v788 = vpop.f32.mrf.mxu0
    %v789 = vadd.f32 0.0, %v788
    %v790 = vpop.f32.mrf.mxu0
    %791 = vmatprep.mubr.bf16.mxu0 0
    %792 = vmatmul.mubr.bf16.gmra.mxu0 %v530
    %v793 = vpop.f32.mrf.mxu0
    %v794 = vadd.f32 0.0, %v793
    %v795 = vpop.f32.mrf.mxu0
    %v796 = vpop.f32.mrf.mxu0
    %v797 = vadd.f32 0.0, %v796
    %v798 = vpop.f32.mrf.mxu0
    %799 = vmatprep.mubr.bf16.mxu0 0
    %800 = vmatmul.mubr.bf16.gmra.mxu0 %v531
    %v801 = vpop.f32.mrf.mxu0
    %v802 = vadd.f32 0.0, %v801
    %v803 = vpop.f32.mrf.mxu0
    %v804 = vpop.f32.mrf.mxu0
    %v805 = vadd.f32 0.0, %v804
    %v806 = vpop.f32.mrf.mxu0
    %807 = vmatprep.mubr.bf16.mxu0 0
    %808 = vmatmul.mubr.bf16.gmra.mxu0 %v532
    %v809 = vpop.f32.mrf.mxu0
    %v810 = vadd.f32 0.0, %v809
    %v811 = vpop.f32.mrf.mxu0
    %v812 = vpop.f32.mrf.mxu0
    %v813 = vadd.f32 0.0, %v812
    %v814 = vpop.f32.mrf.mxu0
    %815 = vmatprep.mubr.bf16.mxu0 0
    %816 = vmatmul.mubr.bf16.gmra.mxu0 %v533
    %v817 = vpop.f32.mrf.mxu0
    %v818 = vadd.f32 0.0, %v817
    %v819 = vpop.f32.mrf.mxu0
    %v820 = vpop.f32.mrf.mxu0
    %v821 = vadd.f32 0.0, %v820
    %v822 = vpop.f32.mrf.mxu0
    %823 = vdwg.mxu0
    %v824 = vld [vmem:[#allocation5] sm:$0xff]
    %v825 = vld [vmem:[#allocation5 + $0x8] sm:$0xff]
    %v826 = vld [vmem:[#allocation5 + $0x10] sm:$0xff]
    %v827 = vld [vmem:[#allocation5 + $0x18] sm:$0xff]
    %v828 = vld [vmem:[#allocation5 + $0x20] sm:$0xff]
    %v829 = vld [vmem:[#allocation5 + $0x28] sm:$0xff]
    %v830 = vld [vmem:[#allocation5 + $0x30] sm:$0xff]
    %v831 = vld [vmem:[#allocation5 + $0x38] sm:$0xff]
    %v832 = vld [vmem:[#allocation5 + $0x40] sm:$0xff]
    %v833 = vld [vmem:[#allocation5 + $0x48] sm:$0xff]
    %v834 = vld [vmem:[#allocation5 + $0x50] sm:$0xff]
    %v835 = vld [vmem:[#allocation5 + $0x58] sm:$0xff]
    %v836 = vld [vmem:[#allocation5 + $0x60] sm:$0xff]
    %v837 = vld [vmem:[#allocation5 + $0x68] sm:$0xff]
    %v838 = vld [vmem:[#allocation5 + $0x70] sm:$0xff]
    %v839 = vld [vmem:[#allocation5 + $0x78] sm:$0xff]
    %v840 = vmul.f32 %v762, %v44
    %v841 = vmul.f32 %v765, %v49
    %v842 = vmul.f32 %v770, %v54
    %v843 = vmul.f32 %v773, %v59
    %v844 = vmul.f32 %v778, %v64
    %v845 = vmul.f32 %v781, %v69
    %v846 = vmul.f32 %v786, %v74
    %v847 = vmul.f32 %v789, %v79
    %v848 = vmul.f32 %v794, %v84
    %v849 = vmul.f32 %v797, %v89
    %v850 = vmul.f32 %v802, %v94
    %v851 = vmul.f32 %v805, %v99
    %v852 = vmul.f32 %v810, %v104
    %v853 = vmul.f32 %v813, %v109
    %v854 = vmul.f32 %v818, %v114
    %v855 = vmul.f32 %v821, %v119
    %v856 = vadd.f32 %v824, %v840
    %v857 = vadd.f32 %v825, %v841
    %v858 = vadd.f32 %v826, %v842
    %v859 = vadd.f32 %v827, %v843
    %v860 = vadd.f32 %v828, %v844
    %v861 = vadd.f32 %v829, %v845
    %v862 = vadd.f32 %v830, %v846
    %v863 = vadd.f32 %v831, %v847
    %v864 = vadd.f32 %v832, %v848
    %v865 = vadd.f32 %v833, %v849
    %v866 = vadd.f32 %v834, %v850
    %v867 = vadd.f32 %v835, %v851
    %v868 = vadd.f32 %v836, %v852
    %v869 = vadd.f32 %v837, %v853
    %v870 = vadd.f32 %v838, %v854
    %v871 = vadd.f32 %v839, %v855
    %872 = vst [vmem:[#allocation5] sm:$0xff] %v856
    %873 = vst [vmem:[#allocation5 + $0x8] sm:$0xff] %v857
    %874 = vst [vmem:[#allocation5 + $0x10] sm:$0xff] %v858
    %875 = vst [vmem:[#allocation5 + $0x18] sm:$0xff] %v859
    %876 = vst [vmem:[#allocation5 + $0x20] sm:$0xff] %v860
    %877 = vst [vmem:[#allocation5 + $0x28] sm:$0xff] %v861
    %878 = vst [vmem:[#allocation5 + $0x30] sm:$0xff] %v862
    %879 = vst [vmem:[#allocation5 + $0x38] sm:$0xff] %v863
    %880 = vst [vmem:[#allocation5 + $0x40] sm:$0xff] %v864
    %881 = vst [vmem:[#allocation5 + $0x48] sm:$0xff] %v865
    %882 = vst [vmem:[#allocation5 + $0x50] sm:$0xff] %v866
    %883 = vst [vmem:[#allocation5 + $0x58] sm:$0xff] %v867
    %884 = vst [vmem:[#allocation5 + $0x60] sm:$0xff] %v868
    %885 = vst [vmem:[#allocation5 + $0x68] sm:$0xff] %v869
    %886 = vst [vmem:[#allocation5 + $0x70] sm:$0xff] %v870
    %887 = vst [vmem:[#allocation5 + $0x78] sm:$0xff] %v871
    %v888 = vld [vmem:[#allocation5] sm:$0xff]
    %v889 = vld [vmem:[#allocation5 + $0x8] sm:$0xff]
    %v890 = vld [vmem:[#allocation5 + $0x10] sm:$0xff]
    %v891 = vld [vmem:[#allocation5 + $0x18] sm:$0xff]
    %v892 = vld [vmem:[#allocation5 + $0x20] sm:$0xff]
    %v893 = vld [vmem:[#allocation5 + $0x28] sm:$0xff]
    %v894 = vld [vmem:[#allocation5 + $0x30] sm:$0xff]
    %v895 = vld [vmem:[#allocation5 + $0x38] sm:$0xff]
    %v896 = vld [vmem:[#allocation5 + $0x40] sm:$0xff]
    %v897 = vld [vmem:[#allocation5 + $0x48] sm:$0xff]
    %v898 = vld [vmem:[#allocation5 + $0x50] sm:$0xff]
    %v899 = vld [vmem:[#allocation5 + $0x58] sm:$0xff]
    %v900 = vld [vmem:[#allocation5 + $0x60] sm:$0xff]
    %v901 = vld [vmem:[#allocation5 + $0x68] sm:$0xff]
    %v902 = vld [vmem:[#allocation5 + $0x70] sm:$0xff]
    %v903 = vld [vmem:[#allocation5 + $0x78] sm:$0xff]
    %v904 = vmul.f32 %v888, 0.25
    %v905 = vmul.f32 %v889, 0.25
    %v906 = vmul.f32 %v890, 0.25
    %v907 = vmul.f32 %v891, 0.25
    %v908 = vmul.f32 %v892, 0.25
    %v909 = vmul.f32 %v893, 0.25
    %v910 = vmul.f32 %v894, 0.25
    %v911 = vmul.f32 %v895, 0.25
    %v912 = vmul.f32 %v896, 0.25
    %v913 = vmul.f32 %v897, 0.25
    %v914 = vmul.f32 %v898, 0.25
    %v915 = vmul.f32 %v899, 0.25
    %v916 = vmul.f32 %v900, 0.25
    %v917 = vmul.f32 %v901, 0.25
    %v918 = vmul.f32 %v902, 0.25
    %v919 = vmul.f32 %v903, 0.25
    %920 = vst [vmem:[#allocation5] sm:$0xff] %v904
    %921 = vst [vmem:[#allocation5 + $0x8] sm:$0xff] %v905
    %922 = vst [vmem:[#allocation5 + $0x10] sm:$0xff] %v906
    %923 = vst [vmem:[#allocation5 + $0x18] sm:$0xff] %v907
    %924 = vst [vmem:[#allocation5 + $0x20] sm:$0xff] %v908
    %925 = vst [vmem:[#allocation5 + $0x28] sm:$0xff] %v909
    %926 = vst [vmem:[#allocation5 + $0x30] sm:$0xff] %v910
    %927 = vst [vmem:[#allocation5 + $0x38] sm:$0xff] %v911
    %928 = vst [vmem:[#allocation5 + $0x40] sm:$0xff] %v912
    %929 = vst [vmem:[#allocation5 + $0x48] sm:$0xff] %v913
    %930 = vst [vmem:[#allocation5 + $0x50] sm:$0xff] %v914
    %931 = vst [vmem:[#allocation5 + $0x58] sm:$0xff] %v915
    %932 = vst [vmem:[#allocation5 + $0x60] sm:$0xff] %v916
    %933 = vst [vmem:[#allocation5 + $0x68] sm:$0xff] %v917
    %934 = vst [vmem:[#allocation5 + $0x70] sm:$0xff] %v918
    %935 = vst [vmem:[#allocation5 + $0x78] sm:$0xff] %v919
    // Predicated region
    $region14: #{tpu_custom_call.1} parent=1 // pred_check
      _
    $region15: #{tpu_custom_call.1} parent=1 // pred_check_branch
      %937 = sbr.rel (0) target = $region17
    $region16: #{tpu_custom_call.1} parent=1 // pred_region
      %s939 = ssub.s32 2048, 2048
      %940 = vsyncadd [#allocation6], %s939
      %s941 = sshll.u32 [#allocation5], 4
      %s942 = int_to_ptr.vmem [resolvable:$true] %s941
      %947 = dma.vmem_to_hbm [thread:$0]  %s942, 2048, %s3, [#allocation6], 128, 128, 8
    $region17: #{tpu_custom_call.1} parent=1 // pred_fallthru
      _
    // Predicated region
    $region18: #{tpu_custom_call.1} parent=1 // pred_check
      _
    $region19: #{tpu_custom_call.1} parent=1 // pred_check_branch
      %949 = sbr.rel (0) target = $region21
    $region20: #{tpu_custom_call.1} parent=1 // pred_region
      %950 = dma.done [#allocation6], 2048
    $region21: #{tpu_custom_call.1} parent=1 // pred_fallthru
      _
    %951 = vsyncpa [#allocation6], 1
  %952 = vsyncmov [#allocation4]
  %s953 = vpop.sfrf %952
  %p954 = scmp.eq.s32.totalorder %s953, 0
  %p955 = pneg %p954
  %957 = shalt.err (%p955)
  %s958 = scalar_lea.sflag [#allocation4], 1
  %959 = vsyncmov %s958
  %s960 = vpop.sfrf %959
  %p961 = scmp.eq.s32.totalorder %s960, 0
  %p962 = pneg %p961
  %964 = shalt.err (%p962)

</llo_original>
